<compile_context>
chip_gen: v7x
topology: tpu7x:2x2x1
jax: 0.10.0
libtpu: 0.0.40
codegen_flags: <defaults>
</compile_context>

<pallas_src>
import jax
import jax.numpy as jnp
from jax.experimental import pallas as pl
from jax.experimental.pallas import tpu as pltpu

ACTION_DIM = 8
STATE_DIM = 280
HIDDEN_DIM = 140

# Lane-padded ("kernel") hidden dims.  Output stays at its true width (8).
H1_PAD = 256   # 140 -> 256
H2_PAD = 128   # 70  -> 128

DEFAULT_BATCH_TILE = 2048  # rows per grid step; ~8-11 MiB VMEM, safe on v5e/v6e/v7x


def _round_up(x, m):
    return ((x + m - 1) // m) * m


def _choose_batch_tile(batch, batch_tile):
    """Multiple of 8, capped at batch_tile, and capped at ~ceil(B/2) so that
    large batches produce >= 2 grid steps (v7x has 2 TensorCores)."""
    half = _round_up(max(1, -(-batch // 2)), 8)
    return max(8, min(batch_tile, half))


def agent_m1_kernel(x_ref, w1_ref, b1_ref, w2_ref, b2_ref, w3_ref, b3_ref, o_ref):
    # x tile fed to the MXU as bf16 (no-op if already bf16); accumulate in f32.
    x = x_ref[...].astype(jnp.bfloat16)

    # fc1 + relu  (dropout = identity in eval mode)
    h1 = jnp.dot(x, w1_ref[...], preferred_element_type=jnp.float32) + b1_ref[...]
    h1 = jnp.maximum(h1, 0.0).astype(jnp.bfloat16)

    # fc2 + relu  (dropout = identity in eval mode)
    h2 = jnp.dot(h1, w2_ref[...], preferred_element_type=jnp.float32) + b2_ref[...]
    h2 = jnp.maximum(h2, 0.0).astype(jnp.bfloat16)

    # fc3 (logits), written at the true 8-column width.
    o_ref[...] = jnp.dot(h2, w3_ref[...], preferred_element_type=jnp.float32) + b3_ref[...]


def agent_m1_forward(x, kernel_params, *, batch_tile=DEFAULT_BATCH_TILE,
                     vmem_limit_bytes=32 << 20):
    """x: (B, STATE_DIM) float32 (or bfloat16) -> logits (B, ACTION_DIM) float32.

    kernel_params: padded/bf16 params from prepare_kernel_params().
    """
    w1, b1, w2, b2, w3, b3 = kernel_params
    B = x.shape[0]

    tb = _choose_batch_tile(B, batch_tile)
    grid = (pl.cdiv(B, tb),)  # partial last block: reads unused rows, masks writes

    def resident(arr):
        return pl.BlockSpec(arr.shape, lambda i: (0,) * arr.ndim)

    flops = 2 * B * (STATE_DIM * H1_PAD + H1_PAD * H2_PAD + H2_PAD * ACTION_DIM)
    bytes_accessed = (
        B * STATE_DIM * x.dtype.itemsize                                    # x stream
        + B * ACTION_DIM * 4                                                # logits
        + (STATE_DIM * H1_PAD + H1_PAD * H2_PAD + H2_PAD * ACTION_DIM) * 2  # bf16 weights
        + (H1_PAD + H2_PAD + ACTION_DIM) * 4                                # biases
    )

    return pl.pallas_call(
        agent_m1_kernel,
        out_shape=jax.ShapeDtypeStruct((B, ACTION_DIM), jnp.float32),
        grid_spec=pltpu.PrefetchScalarGridSpec(
            num_scalar_prefetch=0,
            grid=grid,
            in_specs=[
                pl.BlockSpec((tb, STATE_DIM), lambda i: (i, 0)),  # x: tiled over batch
                resident(w1), resident(b1),                       # weights stay resident
                resident(w2), resident(b2),
                resident(w3), resident(b3),
            ],
            out_specs=pl.BlockSpec((tb, ACTION_DIM), lambda i: (i, 0)),
        ),
        compiler_params=pltpu.CompilerParams(
            dimension_semantics=("parallel",),
            vmem_limit_bytes=vmem_limit_bytes,
        ),
        cost_estimate=pl.CostEstimate(
            flops=flops, transcendentals=0, bytes_accessed=bytes_accessed),
    )(x, w1, b1, w2, b2, w3, b3)


def init_params(key):
    """Deterministic init mimicking PyTorch nn.Linear default U(-1/sqrt(fan_in), ...).
    Weights returned already transposed to (in_dim, out_dim), f32, UNPADDED."""
    dims = [(STATE_DIM, HIDDEN_DIM), (HIDDEN_DIM, HIDDEN_DIM // 2),
            (HIDDEN_DIM // 2, ACTION_DIM)]
    params = []
    keys = jax.random.split(key, 2 * len(dims))
    for i, (fan_in, fan_out) in enumerate(dims):
        bound = 1.0 / (fan_in ** 0.5)
        w = jax.random.uniform(keys[2 * i], (fan_in, fan_out),
                               minval=-bound, maxval=bound, dtype=jnp.float32)
        b = jax.random.uniform(keys[2 * i + 1], (1, fan_out),
                               minval=-bound, maxval=bound, dtype=jnp.float32)
        params += [w, b]
    return tuple(params)


def prepare_kernel_params(params):
    """Zero-pad hidden feature dims to lane multiples and cast weights to bf16.

    Zero padding keeps the math exact: padded weight columns produce 0, padded
    biases are 0, ReLU(0)=0, and padded weight rows multiply those zeros.
    The output dimension (8) is NOT padded.
    """
    w1, b1, w2, b2, w3, b3 = params

    def pad_w(w, out_rows, out_cols):
        r, c = w.shape
        return jnp.pad(w, ((0, out_rows - r), (0, out_cols - c))).astype(jnp.bfloat16)

    def pad_b(b, out_cols):
        return jnp.pad(b, ((0, 0), (0, out_cols - b.shape[1]))).astype(jnp.float32)

    return (
        pad_w(w1, STATE_DIM, H1_PAD), pad_b(b1, H1_PAD),
        pad_w(w2, H1_PAD, H2_PAD),    pad_b(b2, H2_PAD),
        pad_w(w3, H2_PAD, ACTION_DIM), pad_b(b3, ACTION_DIM),  # pad input side only
    )


if __name__ == "__main__":
    key = jax.random.PRNGKey(0)
    pkey, xkey = jax.random.split(key)
    params = init_params(pkey)
    kparams = prepare_kernel_params(params)

    # B=10 deliberately exercises the ragged last block (no jnp.pad path) and
    # produces 2 grid steps (tb=8), covering the multi-step / masked-write path.
    B = 10
    x = jax.random.normal(xkey, (B, STATE_DIM), dtype=jnp.float32)

    logits = agent_m1_forward(x, kparams)
    jax.block_until_ready(logits)

    # Reference in plain JAX using the same bf16-input / f32-accumulate math
    # (unpadded weights; zero padding does not change results).
    w1, b1, w2, b2, w3, b3 = params
    xb = x.astype(jnp.bfloat16)
    h1 = jnp.maximum(
        jnp.dot(xb, w1.astype(jnp.bfloat16), preferred_element_type=jnp.float32) + b1, 0.0)
    h2 = jnp.maximum(
        jnp.dot(h1.astype(jnp.bfloat16), w2.astype(jnp.bfloat16),
                preferred_element_type=jnp.float32) + b2, 0.0)
    ref = jnp.dot(h2.astype(jnp.bfloat16), w3.astype(jnp.bfloat16),
                  preferred_element_type=jnp.float32) + b3

    assert logits.shape == (B, ACTION_DIM)
    assert jnp.allclose(logits, ref, atol=2e-3, rtol=2e-3)

    print("KERNEL_OK")
</pallas_src>

<mosaic_0001>
module attributes {stable_mosaic.version = 11 : i64} {
  func.func @agent_m1_kernel(%arg0: i32, %arg1: memref<8x280xf32, #tpu.memory_space<vmem>>, %arg2: memref<280x256xbf16, #tpu.memory_space<vmem>>, %arg3: memref<1x256xf32, #tpu.memory_space<vmem>>, %arg4: memref<256x128xbf16, #tpu.memory_space<vmem>>, %arg5: memref<1x128xf32, #tpu.memory_space<vmem>>, %arg6: memref<128x8xbf16, #tpu.memory_space<vmem>>, %arg7: memref<1x8xf32, #tpu.memory_space<vmem>>, %arg8: memref<8x8xf32, #tpu.memory_space<vmem>>) attributes {dimension_semantics = [#tpu.dimension_semantics<parallel>], iteration_bounds = array<i64: 2>, scalar_prefetch = 0 : i64, scratch_operands = 0 : i64, tpu.core_type = #tpu.core_type<tc>, window_params = [{transform_indices = @transform_0, window_bounds = array<i64: 8, 280>}, {pipeline_mode = #tpu.pipeline_mode<synchronous>, transform_indices = @transform_1, window_bounds = array<i64: 280, 256>}, {pipeline_mode = #tpu.pipeline_mode<synchronous>, transform_indices = @transform_2, window_bounds = array<i64: 1, 256>}, {pipeline_mode = #tpu.pipeline_mode<synchronous>, transform_indices = @transform_3, window_bounds = array<i64: 256, 128>}, {pipeline_mode = #tpu.pipeline_mode<synchronous>, transform_indices = @transform_4, window_bounds = array<i64: 1, 128>}, {pipeline_mode = #tpu.pipeline_mode<synchronous>, transform_indices = @transform_5, window_bounds = array<i64: 128, 8>}, {pipeline_mode = #tpu.pipeline_mode<synchronous>, transform_indices = @transform_6, window_bounds = array<i64: 1, 8>}, {transform_indices = @transform_7, window_bounds = array<i64: 8, 8>}]} {
    %c0 = arith.constant 0 : index
    %c0_0 = arith.constant 0 : index
    %0 = vector.load %arg1[%c0, %c0_0] : memref<8x280xf32, #tpu.memory_space<vmem>>, vector<8x280xf32>
    %1 = arith.truncf %0 : vector<8x280xf32> to vector<8x280xbf16>
    %c0_1 = arith.constant 0 : index
    %c0_2 = arith.constant 0 : index
    %2 = vector.load %arg2[%c0_1, %c0_2] : memref<280x256xbf16, #tpu.memory_space<vmem>>, vector<280x256xbf16>
    %cst = arith.constant dense<0.000000e+00> : vector<8x256xf32>
    %3 = tpu.matmul %1, %2, %cst {dimension_numbers = #tpu.dot_dimension_numbers<[1], [0], [0], [1], [0, 0, 1, 1], [], []>} : vector<8x280xbf16>, vector<280x256xbf16>, vector<8x256xf32> -> vector<8x256xf32>
    %c0_3 = arith.constant 0 : index
    %c0_4 = arith.constant 0 : index
    %4 = vector.load %arg3[%c0_3, %c0_4] : memref<1x256xf32, #tpu.memory_space<vmem>>, vector<1x256xf32>
    %5 = vector.broadcast %4 : vector<1x256xf32> to vector<8x256xf32>
    %6 = arith.addf %3, %5 : vector<8x256xf32>
    %cst_5 = arith.constant 0.000000e+00 : f32
    %7 = vector.broadcast %cst_5 : f32 to vector<8x256xf32>
    %8 = arith.maximumf %6, %7 : vector<8x256xf32>
    %9 = arith.truncf %8 : vector<8x256xf32> to vector<8x256xbf16>
    %c0_6 = arith.constant 0 : index
    %c0_7 = arith.constant 0 : index
    %10 = vector.load %arg4[%c0_6, %c0_7] : memref<256x128xbf16, #tpu.memory_space<vmem>>, vector<256x128xbf16>
    %cst_8 = arith.constant dense<0.000000e+00> : vector<8x128xf32>
    %11 = tpu.matmul %9, %10, %cst_8 {dimension_numbers = #tpu.dot_dimension_numbers<[1], [0], [0], [1], [0, 0, 1, 1], [], []>} : vector<8x256xbf16>, vector<256x128xbf16>, vector<8x128xf32> -> vector<8x128xf32>
    %c0_9 = arith.constant 0 : index
    %c0_10 = arith.constant 0 : index
    %12 = vector.load %arg5[%c0_9, %c0_10] : memref<1x128xf32, #tpu.memory_space<vmem>>, vector<1x128xf32>
    %13 = vector.broadcast %12 : vector<1x128xf32> to vector<8x128xf32>
    %14 = arith.addf %11, %13 : vector<8x128xf32>
    %cst_11 = arith.constant 0.000000e+00 : f32
    %15 = vector.broadcast %cst_11 : f32 to vector<8x128xf32>
    %16 = arith.maximumf %14, %15 : vector<8x128xf32>
    %17 = arith.truncf %16 : vector<8x128xf32> to vector<8x128xbf16>
    %c0_12 = arith.constant 0 : index
    %c0_13 = arith.constant 0 : index
    %18 = vector.load %arg6[%c0_12, %c0_13] : memref<128x8xbf16, #tpu.memory_space<vmem>>, vector<128x8xbf16>
    %cst_14 = arith.constant dense<0.000000e+00> : vector<8x8xf32>
    %19 = tpu.matmul %17, %18, %cst_14 {dimension_numbers = #tpu.dot_dimension_numbers<[1], [0], [0], [1], [0, 0, 1, 1], [], []>} : vector<8x128xbf16>, vector<128x8xbf16>, vector<8x8xf32> -> vector<8x8xf32>
    %c0_15 = arith.constant 0 : index
    %c0_16 = arith.constant 0 : index
    %20 = vector.load %arg7[%c0_15, %c0_16] : memref<1x8xf32, #tpu.memory_space<vmem>>, vector<1x8xf32>
    %21 = vector.broadcast %20 : vector<1x8xf32> to vector<8x8xf32>
    %22 = arith.addf %19, %21 : vector<8x8xf32>
    %c0_17 = arith.constant 0 : index
    %c0_18 = arith.constant 0 : index
    %23 = vector.load %arg8[%c0_17, %c0_18] : memref<8x8xf32, #tpu.memory_space<vmem>>, vector<8x8xf32>
    tpu.vector_store %arg8[%c0_17, %c0_18], %22 {strides = array<i32>} : memref<8x8xf32, #tpu.memory_space<vmem>>, vector<8x8xf32>,
    return
  }
  func.func @transform_0(%arg0: i32) -> (i32, i32) {
    %c0_i32 = arith.constant 0 : i32
    %c0_i32_0 = arith.constant 0 : i32
    return %arg0, %c0_i32 : i32, i32
  }
  func.func @transform_1(%arg0: i32) -> (i32, i32) {
    %c0_i32 = arith.constant 0 : i32
    %c0_i32_0 = arith.constant 0 : i32
    %c0_i32_1 = arith.constant 0 : i32
    return %c0_i32, %c0_i32_0 : i32, i32
  }
  func.func @transform_2(%arg0: i32) -> (i32, i32) {
    %c0_i32 = arith.constant 0 : i32
    %c0_i32_0 = arith.constant 0 : i32
    %c0_i32_1 = arith.constant 0 : i32
    return %c0_i32, %c0_i32_0 : i32, i32
  }
  func.func @transform_3(%arg0: i32) -> (i32, i32) {
    %c0_i32 = arith.constant 0 : i32
    %c0_i32_0 = arith.constant 0 : i32
    %c0_i32_1 = arith.constant 0 : i32
    return %c0_i32, %c0_i32_0 : i32, i32
  }
  func.func @transform_4(%arg0: i32) -> (i32, i32) {
    %c0_i32 = arith.constant 0 : i32
    %c0_i32_0 = arith.constant 0 : i32
    %c0_i32_1 = arith.constant 0 : i32
    return %c0_i32, %c0_i32_0 : i32, i32
  }
  func.func @transform_5(%arg0: i32) -> (i32, i32) {
    %c0_i32 = arith.constant 0 : i32
    %c0_i32_0 = arith.constant 0 : i32
    %c0_i32_1 = arith.constant 0 : i32
    return %c0_i32, %c0_i32_0 : i32, i32
  }
  func.func @transform_6(%arg0: i32) -> (i32, i32) {
    %c0_i32 = arith.constant 0 : i32
    %c0_i32_0 = arith.constant 0 : i32
    %c0_i32_1 = arith.constant 0 : i32
    return %c0_i32, %c0_i32_0 : i32, i32
  }
  func.func @transform_7(%arg0: i32) -> (i32, i32) {
    %c0_i32 = arith.constant 0 : i32
    %c0_i32_0 = arith.constant 0 : i32
    return %arg0, %c0_i32 : i32, i32
  }
}

</mosaic_0001>

<llo_original>
// kernel: tpu_custom_call.1
$region0: #{tpu_custom_call.1}
  #allocation0 [shape = 'u32[]', space=smem, size = 0x4, offset = 0x4, fixed_abs, tag = 'smem constant byte address 0x4 - core index']
  #allocation1 [shape = 'u32[144,128]{1,0:T(1,128)}', space=vmem, size = 0x12000, scoped, tag = 'internal scratch']
  %s0 = inlined_call_operand.vmem [shape: f32[10,280], index: 0, kind: input, shape index: {}]
  %s1 = inlined_call_operand.hbm [shape: bf16[280,256], index: 1, kind: input, shape index: {}]
  %s2 = inlined_call_operand.vmem [shape: f32[1,256], index: 2, kind: input, shape index: {}]
  %s3 = inlined_call_operand.hbm [shape: bf16[256,128], index: 3, kind: input, shape index: {}]
  %s4 = inlined_call_operand.vmem [shape: f32[1,128], index: 4, kind: input, shape index: {}]
  %s5 = inlined_call_operand.vmem [shape: bf16[128,8], index: 5, kind: input, shape index: {}]
  %s6 = inlined_call_operand.vmem [shape: f32[1,8], index: 6, kind: input, shape index: {}]
  %s7 = inlined_call_operand.vmem [shape: f32[10,8], index: 7, kind: output, shape index: {}]
  %s8 = sld [smem:[#allocation0]]
  $region69: #{tpu_custom_call.1} parent=0
    _
  %s10 = ssub.s32 1, %s8
  %s11 = scalar_select 0, %s10, %s8
  $region1: #{tpu_custom_call.1} parent=0
    #allocation2 [shape = 'u8[143360]{0}', space=vmem, size = 0x23000, scoped, tag = 'input window, operand 1, single buffered']
    #allocation3 [shape = 's32[2]{0}', space=sflag, size = 0x8, scoped, tag = 'scoped memory for tpu_custom_call.1']
    #allocation4 [shape = 'u8[65536]{0}', space=vmem, size = 0x10000, scoped, tag = 'input window, operand 3, single buffered']
    #allocation5 [shape = 's32[1]{0}', space=sflag, size = 0x4, scoped, tag = 'scoped memory for tpu_custom_call.1']
    %12 = vsyncpa [#allocation3], 0
    %13 = vsyncpa [#allocation5], 0
    loop: start=0, step=1, limit=4
    $region2: #{tpu_custom_call.1} parent=1 // loop_pre_header
      _
    $region3: #{tpu_custom_call.1} parent=1 // loop_header
      %s15 = sphi 0, %s19
      %p16 = scmp.ge.s32.totalorder %s15, 4
      %s25 = sphi 0, %s27
      %s28 = sphi 0, %s25
      %s29 = sphi 0, %s28
      %s45 = sphi 0, %s29
      %s49 = sphi 0, %s49
      %s51 = sphi 0, %s49
      %s52 = sphi 0, %s51
      %s66 = sphi 0, %s52
      %s70 = sphi 0, %s70
      %s72 = sphi 0, %s70
      %s73 = sphi 0, %s72
      %s87 = sphi 0, %s73
      %s91 = sphi 0, %s91
      %s93 = sphi 0, %s91
      %s94 = sphi 0, %s93
      %s108 = sphi 0, %s94
      %s112 = sphi 0, %s112
      %s114 = sphi 0, %s112
      %s115 = sphi 0, %s114
      %s129 = sphi 0, %s115
      %s133 = sphi 0, %s133
      %s135 = sphi 0, %s133
      %s136 = sphi 0, %s135
      %s150 = sphi 0, %s136
      %s154 = sphi 0, %s154
      %s156 = sphi 0, %s154
      %s157 = sphi 0, %s156
      %s171 = sphi 0, %s157
      %s177 = sphi 0, %s179
      %s180 = sphi 0, %s177
      %s181 = sphi 0, %s180
      %s197 = sphi 0, %s181
    $region4: #{tpu_custom_call.1} parent=1 // loop_header_branch
      %18 = sbr.rel (%p16) target = $region8
    $region5: #{tpu_custom_call.1} parent=1 // loop_body
      %s20 = ssub.s32 %s15, 1
      %s21 = ssub.s32 %s15, 2
      %s22 = sadd.s32 %s15, 1
      %s23 = ssub.s32 %s15, %s22
      %p24 = scmp.eq.s32.totalorder %s23, 0
      %s26 = sadd.s32 %s25, 1
      %s27 = scalar_select %p24, %s25, %s26
      %p30 = pneg %p24
      %p31 = scmp.eq.s32.totalorder %s15, 1
      %p32 = por %p30, %p31
      %p33 = scmp.ne.s32.totalorder %s25, %s28
      %p34 = scmp.eq.s32.totalorder %s15, 0
      %p35 = por %p33, %p34
      %p36 = scmp.ne.s32.totalorder %s25, %s28
      %p37 = scmp.eq.s32.totalorder %s20, 1
      %p38 = por %p36, %p37
      %p39 = scmp.ne.s32.totalorder %s28, %s29
      %p40 = scmp.eq.s32.totalorder %s20, 0
      %p41 = por %p39, %p40
      %p42 = scmp.ne.s32.totalorder %s28, %s29
      %p43 = scmp.eq.s32.totalorder %s21, 1
      %p44 = por %p42, %p43
      %p46 = scmp.ne.s32.totalorder %s29, %s45
      %p47 = scmp.eq.s32.totalorder %s21, 0
      %p48 = por %p46, %p47
      %s50 = sadd.s32 %s49, 1
      %p53 = scmp.eq.s32.totalorder %s15, 1
      %p54 = scmp.ne.s32.totalorder %s49, %s51
      %p55 = scmp.eq.s32.totalorder %s15, 0
      %p56 = por %p54, %p55
      %p57 = scmp.ne.s32.totalorder %s49, %s51
      %p58 = scmp.eq.s32.totalorder %s20, 1
      %p59 = por %p57, %p58
      %p60 = scmp.ne.s32.totalorder %s51, %s52
      %p61 = scmp.eq.s32.totalorder %s20, 0
      %p62 = por %p60, %p61
      %p63 = scmp.ne.s32.totalorder %s51, %s52
      %p64 = scmp.eq.s32.totalorder %s21, 1
      %p65 = por %p63, %p64
      %p67 = scmp.ne.s32.totalorder %s52, %s66
      %p68 = scmp.eq.s32.totalorder %s21, 0
      %p69 = por %p67, %p68
      %s71 = sadd.s32 %s70, 1
      %p74 = scmp.eq.s32.totalorder %s15, 1
      %p75 = scmp.ne.s32.totalorder %s70, %s72
      %p76 = scmp.eq.s32.totalorder %s15, 0
      %p77 = por %p75, %p76
      %p78 = scmp.ne.s32.totalorder %s70, %s72
      %p79 = scmp.eq.s32.totalorder %s20, 1
      %p80 = por %p78, %p79
      %p81 = scmp.ne.s32.totalorder %s72, %s73
      %p82 = scmp.eq.s32.totalorder %s20, 0
      %p83 = por %p81, %p82
      %p84 = scmp.ne.s32.totalorder %s72, %s73
      %p85 = scmp.eq.s32.totalorder %s21, 1
      %p86 = por %p84, %p85
      %p88 = scmp.ne.s32.totalorder %s73, %s87
      %p89 = scmp.eq.s32.totalorder %s21, 0
      %p90 = por %p88, %p89
      %s92 = sadd.s32 %s91, 1
      %p95 = scmp.eq.s32.totalorder %s15, 1
      %p96 = scmp.ne.s32.totalorder %s91, %s93
      %p97 = scmp.eq.s32.totalorder %s15, 0
      %p98 = por %p96, %p97
      %p99 = scmp.ne.s32.totalorder %s91, %s93
      %p100 = scmp.eq.s32.totalorder %s20, 1
      %p101 = por %p99, %p100
      %p102 = scmp.ne.s32.totalorder %s93, %s94
      %p103 = scmp.eq.s32.totalorder %s20, 0
      %p104 = por %p102, %p103
      %p105 = scmp.ne.s32.totalorder %s93, %s94
      %p106 = scmp.eq.s32.totalorder %s21, 1
      %p107 = por %p105, %p106
      %p109 = scmp.ne.s32.totalorder %s94, %s108
      %p110 = scmp.eq.s32.totalorder %s21, 0
      %p111 = por %p109, %p110
      %s113 = sadd.s32 %s112, 1
      %p116 = scmp.eq.s32.totalorder %s15, 1
      %p117 = scmp.ne.s32.totalorder %s112, %s114
      %p118 = scmp.eq.s32.totalorder %s15, 0
      %p119 = por %p117, %p118
      %p120 = scmp.ne.s32.totalorder %s112, %s114
      %p121 = scmp.eq.s32.totalorder %s20, 1
      %p122 = por %p120, %p121
      %p123 = scmp.ne.s32.totalorder %s114, %s115
      %p124 = scmp.eq.s32.totalorder %s20, 0
      %p125 = por %p123, %p124
      %p126 = scmp.ne.s32.totalorder %s114, %s115
      %p127 = scmp.eq.s32.totalorder %s21, 1
      %p128 = por %p126, %p127
      %p130 = scmp.ne.s32.totalorder %s115, %s129
      %p131 = scmp.eq.s32.totalorder %s21, 0
      %p132 = por %p130, %p131
      %s134 = sadd.s32 %s133, 1
      %p137 = scmp.eq.s32.totalorder %s15, 1
      %p138 = scmp.ne.s32.totalorder %s133, %s135
      %p139 = scmp.eq.s32.totalorder %s15, 0
      %p140 = por %p138, %p139
      %p141 = scmp.ne.s32.totalorder %s133, %s135
      %p142 = scmp.eq.s32.totalorder %s20, 1
      %p143 = por %p141, %p142
      %p144 = scmp.ne.s32.totalorder %s135, %s136
      %p145 = scmp.eq.s32.totalorder %s20, 0
      %p146 = por %p144, %p145
      %p147 = scmp.ne.s32.totalorder %s135, %s136
      %p148 = scmp.eq.s32.totalorder %s21, 1
      %p149 = por %p147, %p148
      %p151 = scmp.ne.s32.totalorder %s136, %s150
      %p152 = scmp.eq.s32.totalorder %s21, 0
      %p153 = por %p151, %p152
      %s155 = sadd.s32 %s154, 1
      %p158 = scmp.eq.s32.totalorder %s15, 1
      %p159 = scmp.ne.s32.totalorder %s154, %s156
      %p160 = scmp.eq.s32.totalorder %s15, 0
      %p161 = por %p159, %p160
      %p162 = scmp.ne.s32.totalorder %s154, %s156
      %p163 = scmp.eq.s32.totalorder %s20, 1
      %p164 = por %p162, %p163
      %p165 = scmp.ne.s32.totalorder %s156, %s157
      %p166 = scmp.eq.s32.totalorder %s20, 0
      %p167 = por %p165, %p166
      %p168 = scmp.ne.s32.totalorder %s156, %s157
      %p169 = scmp.eq.s32.totalorder %s21, 1
      %p170 = por %p168, %p169
      %p172 = scmp.ne.s32.totalorder %s157, %s171
      %p173 = scmp.eq.s32.totalorder %s21, 0
      %p174 = por %p172, %p173
      %s175 = ssub.s32 %s15, %s22
      %p176 = scmp.eq.s32.totalorder %s175, 0
      %s178 = sadd.s32 %s177, 1
      %s179 = scalar_select %p176, %s177, %s178
      %p182 = pneg %p176
      %p183 = scmp.eq.s32.totalorder %s15, 1
      %p184 = por %p182, %p183
      %p185 = scmp.ne.s32.totalorder %s177, %s180
      %p186 = scmp.eq.s32.totalorder %s15, 0
      %p187 = por %p185, %p186
      %p188 = scmp.ne.s32.totalorder %s177, %s180
      %p189 = scmp.eq.s32.totalorder %s20, 1
      %p190 = por %p188, %p189
      %p191 = scmp.ne.s32.totalorder %s180, %s181
      %p192 = scmp.eq.s32.totalorder %s20, 0
      %p193 = por %p191, %p192
      %p194 = scmp.ne.s32.totalorder %s180, %s181
      %p195 = scmp.eq.s32.totalorder %s21, 1
      %p196 = por %p194, %p195
      %p198 = scmp.ne.s32.totalorder %s181, %s197
      %p199 = scmp.eq.s32.totalorder %s21, 0
      %p200 = por %p198, %p199
      %p201 = scmp.le.s32.totalorder 1, %s15
      %p202 = scmp.lt.s32.totalorder %s15, 3
      %p203 = pnand %p201, %p202
      %p204 = pneg %p203
      // Predicated region
      $region9: #{tpu_custom_call.1} parent=5 // pred_check
        _
      $region10: #{tpu_custom_call.1} parent=5 // pred_check_branch
        %206 = sbr.rel (%p203) target = $region12
      $region11: #{tpu_custom_call.1} parent=5 // pred_region
        %s207 = ssub.s32 %s15, 1
        // Predicated region
        $region13: #{tpu_custom_call.1} parent=11 // pred_check
          %p208 = pneg %p62
        $region14: #{tpu_custom_call.1} parent=11 // pred_check_branch
          %210 = sbr.rel (%p208) target = $region16
        $region15: #{tpu_custom_call.1} parent=11 // pred_region
          %s212 = ssub.s32 4480, 4480
          %213 = vsyncadd [#allocation3], %s212
          %s214 = sshll.u32 [#allocation2], 4
          %s215 = int_to_ptr.vmem [resolvable:$true] %s214
          %220 = dma.hbm_to_vmem [thread:$0]  %s1, 4480, %s215, [#allocation3], 128, 128, 8
        $region16: #{tpu_custom_call.1} parent=11 // pred_fallthru
          _
        // Predicated region
        $region17: #{tpu_custom_call.1} parent=11 // pred_check
          %p221 = pneg %p83
        $region18: #{tpu_custom_call.1} parent=11 // pred_check_branch
          %223 = sbr.rel (%p221) target = $region20
        $region19: #{tpu_custom_call.1} parent=11 // pred_region
          _
        $region20: #{tpu_custom_call.1} parent=11 // pred_fallthru
          _
        // Predicated region
        $region21: #{tpu_custom_call.1} parent=11 // pred_check
          %p224 = pneg %p104
        $region22: #{tpu_custom_call.1} parent=11 // pred_check_branch
          %226 = sbr.rel (%p224) target = $region24
        $region23: #{tpu_custom_call.1} parent=11 // pred_region
          %s228 = ssub.s32 2048, 2048
          %229 = vsyncadd [#allocation5], %s228
          %s230 = sshll.u32 [#allocation4], 4
          %s231 = int_to_ptr.vmem [resolvable:$true] %s230
          %236 = dma.hbm_to_vmem [thread:$0]  %s3, 2048, %s231, [#allocation5], 64, 64, 4
        $region24: #{tpu_custom_call.1} parent=11 // pred_fallthru
          _
        // Predicated region
        $region25: #{tpu_custom_call.1} parent=11 // pred_check
          %p237 = pneg %p125
        $region26: #{tpu_custom_call.1} parent=11 // pred_check_branch
          %239 = sbr.rel (%p237) target = $region28
        $region27: #{tpu_custom_call.1} parent=11 // pred_region
          _
        $region28: #{tpu_custom_call.1} parent=11 // pred_fallthru
          _
        // Predicated region
        $region29: #{tpu_custom_call.1} parent=11 // pred_check
          %p240 = pneg %p146
        $region30: #{tpu_custom_call.1} parent=11 // pred_check_branch
          %242 = sbr.rel (%p240) target = $region32
        $region31: #{tpu_custom_call.1} parent=11 // pred_region
          _
        $region32: #{tpu_custom_call.1} parent=11 // pred_fallthru
          _
        // Predicated region
        $region33: #{tpu_custom_call.1} parent=11 // pred_check
          %p243 = pneg %p167
        $region34: #{tpu_custom_call.1} parent=11 // pred_check_branch
          %245 = sbr.rel (%p243) target = $region36
        $region35: #{tpu_custom_call.1} parent=11 // pred_region
          _
        $region36: #{tpu_custom_call.1} parent=11 // pred_fallthru
          _
      $region12: #{tpu_custom_call.1} parent=5 // pred_fallthru
        _
      %p246 = scmp.lt.s32.totalorder %s15, 2
      // Predicated region
      $region37: #{tpu_custom_call.1} parent=5 // pred_check
        %p247 = pneg %p246
      $region38: #{tpu_custom_call.1} parent=5 // pred_check_branch
        %249 = sbr.rel (%p247) target = $region40
      $region39: #{tpu_custom_call.1} parent=5 // pred_region
        // Predicated region
        $region41: #{tpu_custom_call.1} parent=39 // pred_check
          %p250 = pneg %p35
        $region42: #{tpu_custom_call.1} parent=39 // pred_check_branch
          %252 = sbr.rel (%p250) target = $region44
        $region43: #{tpu_custom_call.1} parent=39 // pred_region
          %p253 = scmp.lt.s32.totalorder %s15, 1
          %s254 = scalar_select %p253, %s15, 1
          %s255 = smul.addr %s254, 3
          %s256 = smul.addr %s255, 8
          %s257 = scalar_lea.vmem %s0, %s256
        $region44: #{tpu_custom_call.1} parent=39 // pred_fallthru
          _
      $region40: #{tpu_custom_call.1} parent=5 // pred_fallthru
        _
      %p258 = scmp.le.s32.totalorder 1, %s15
      %p259 = scmp.lt.s32.totalorder %s15, 3
      %p260 = pnand %p258, %p259
      %p261 = pneg %p260
      // Predicated region
      $region45: #{tpu_custom_call.1} parent=5 // pred_check
        _
      $region46: #{tpu_custom_call.1} parent=5 // pred_check_branch
        %263 = sbr.rel (%p260) target = $region48
      $region47: #{tpu_custom_call.1} parent=5 // pred_region
        %s264 = ssub.s32 %s15, 1
        // Predicated region
        $region49: #{tpu_custom_call.1} parent=47 // pred_check
          %p265 = pneg %p62
        $region50: #{tpu_custom_call.1} parent=47 // pred_check_branch
          %267 = sbr.rel (%p265) target = $region52
        $region51: #{tpu_custom_call.1} parent=47 // pred_region
          %268 = dma.done [#allocation3], 4480
        $region52: #{tpu_custom_call.1} parent=47 // pred_fallthru
          _
        // Predicated region
        $region53: #{tpu_custom_call.1} parent=47 // pred_check
          %p269 = pneg %p104
        $region54: #{tpu_custom_call.1} parent=47 // pred_check_branch
          %271 = sbr.rel (%p269) target = $region56
        $region55: #{tpu_custom_call.1} parent=47 // pred_region
          %272 = dma.done [#allocation5], 2048
        $region56: #{tpu_custom_call.1} parent=47 // pred_fallthru
          _
        %p273 = scmp.lt.s32.totalorder %s20, 1
        %s274 = scalar_select %p273, %s20, 1
        %s275 = smul.addr %s274, 3
        %s276 = smul.addr %s275, 8
        %s277 = scalar_lea.vmem %s0, %s276
        %p278 = pneg %p41
        %p279 = pneg %p38
        %p280 = pneg %p62
        %p281 = pneg %p59
        %p282 = pneg %p83
        %p283 = pneg %p80
        %p284 = pneg %p104
        %p285 = pneg %p101
        %p286 = pneg %p125
        %p287 = pneg %p122
        %p288 = pneg %p146
        %p289 = pneg %p143
        %p290 = pneg %p167
        %p291 = pneg %p164
        %p292 = pneg %p193
        %p293 = pneg %p190
        %p294 = scmp.lt.s32.totalorder %s20, 1
        %s295 = scalar_select %p294, %s20, 1
        %s296 = smul.addr %s295, 8
        %s297 = scalar_lea.vmem %s7, %s296
        %p298 = scmp.lt.s32.totalorder %s20, 1
        %s299 = scalar_select %p298, %s20, 1
        %s300 = smul.addr %s299, 3
        %s301 = smul.addr %s300, 8
        %s302 = scalar_lea.vmem %s0, %s301
        %p303 = scmp.lt.s32.totalorder %s20, 1
        %s304 = scalar_select %p303, %s20, 1
        %s305 = smul.addr %s304, 8
        %s306 = scalar_lea.vmem %s7, %s305
        %v308 = vld [vmem:[%s302] sm:$0xff]
        %v309 = vld [vmem:[%s302 + $0x8] sm:$0xff]
        %v310 = vld [vmem:[%s302 + $0x10] sm:$0xff]
        %v311 = vpack.c.bf16 %v308, %v308
        %v312 = vpack.c.bf16 %v309, %v309
        %v313 = vpack.c.bf16 %v310, %v310
        %v314 = vld [vmem:[#allocation2] sm:$0xff]
        %v315 = vld [vmem:[#allocation2 + $0x8] sm:$0xff]
        %v316 = vld [vmem:[#allocation2 + $0x10] sm:$0xff]
        %v317 = vld [vmem:[#allocation2 + $0x18] sm:$0xff]
        %v318 = vld [vmem:[#allocation2 + $0x20] sm:$0xff]
        %v319 = vld [vmem:[#allocation2 + $0x28] sm:$0xff]
        %v320 = vld [vmem:[#allocation2 + $0x30] sm:$0xff]
        %v321 = vld [vmem:[#allocation2 + $0x38] sm:$0xff]
        %v322 = vld [vmem:[#allocation2 + $0x40] sm:$0xff]
        %v323 = vld [vmem:[#allocation2 + $0x48] sm:$0xff]
        %v324 = vld [vmem:[#allocation2 + $0x50] sm:$0xff]
        %v325 = vld [vmem:[#allocation2 + $0x58] sm:$0xff]
        %v326 = vld [vmem:[#allocation2 + $0x60] sm:$0xff]
        %v327 = vld [vmem:[#allocation2 + $0x68] sm:$0xff]
        %v328 = vld [vmem:[#allocation2 + $0x70] sm:$0xff]
        %v329 = vld [vmem:[#allocation2 + $0x78] sm:$0xff]
        %v330 = vld [vmem:[#allocation2 + $0x80] sm:$0xff]
        %v331 = vld [vmem:[#allocation2 + $0x88] sm:$0xff]
        %v332 = vld [vmem:[#allocation2 + $0x90] sm:$0xff]
        %v333 = vld [vmem:[#allocation2 + $0x98] sm:$0xff]
        %v334 = vld [vmem:[#allocation2 + $0xa0] sm:$0xff]
        %v335 = vld [vmem:[#allocation2 + $0xa8] sm:$0xff]
        %v336 = vld [vmem:[#allocation2 + $0xb0] sm:$0xff]
        %v337 = vld [vmem:[#allocation2 + $0xb8] sm:$0xff]
        %v338 = vld [vmem:[#allocation2 + $0xc0] sm:$0xff]
        %v339 = vld [vmem:[#allocation2 + $0xc8] sm:$0xff]
        %v340 = vld [vmem:[#allocation2 + $0xd0] sm:$0xff]
        %v341 = vld [vmem:[#allocation2 + $0xd8] sm:$0xff]
        %v342 = vld [vmem:[#allocation2 + $0xe0] sm:$0xff]
        %v343 = vld [vmem:[#allocation2 + $0xe8] sm:$0xff]
        %v344 = vld [vmem:[#allocation2 + $0xf0] sm:$0xff]
        %v345 = vld [vmem:[#allocation2 + $0xf8] sm:$0xff]
        %v346 = vld [vmem:[#allocation2 + $0x100] sm:$0xff]
        %v347 = vld [vmem:[#allocation2 + $0x108] sm:$0xff]
        %v348 = vld [vmem:[#allocation2 + $0x110] sm:$0xff]
        %v349 = vld [vmem:[%s2] sm:$0x3]
        %v351 = vlaneseq
        %v352 = vshrl.u32 %v351, 7
        %v353 = vsub.s32 0, %v352
        %v354 = vrot.slane %v349, %v353
        %v355 = vlaneseq
        %v356 = vshrl.u32 %v355, 7
        %v357 = vsub.s32 1, %v356
        %v358 = vrot.slane %v349, %v357
        %v396 = vunpack.c.l.b16 %v314
        %v397 = vunpack.c.h.b16 %v314
        %v398 = vunpack.c.l.b16 %v315
        %v399 = vunpack.c.h.b16 %v315
        %v400 = vunpack.c.l.b16 %v316
        %v401 = vunpack.c.h.b16 %v316
        %v402 = vunpack.c.l.b16 %v317
        %v403 = vunpack.c.h.b16 %v317
        %v404 = vunpack.c.l.b16 %v318
        %v405 = vunpack.c.h.b16 %v318
        %v406 = vunpack.c.l.b16 %v319
        %v407 = vunpack.c.h.b16 %v319
        %v408 = vunpack.c.l.b16 %v320
        %v409 = vunpack.c.h.b16 %v320
        %v410 = vunpack.c.l.b16 %v321
        %v411 = vunpack.c.h.b16 %v321
        %v412 = vunpack.c.l.b16 %v322
        %v413 = vunpack.c.h.b16 %v322
        %v414 = vunpack.c.l.b16 %v323
        %v415 = vunpack.c.h.b16 %v323
        %v416 = vunpack.c.l.b16 %v324
        %v417 = vunpack.c.h.b16 %v324
        %v418 = vunpack.c.l.b16 %v325
        %v419 = vunpack.c.h.b16 %v325
        %v420 = vunpack.c.l.b16 %v326
        %v421 = vunpack.c.h.b16 %v326
        %v422 = vunpack.c.l.b16 %v327
        %v423 = vunpack.c.h.b16 %v327
        %v424 = vunpack.c.l.b16 %v328
        %v425 = vunpack.c.h.b16 %v328
        %v426 = vunpack.c.l.b16 %v329
        %v427 = vunpack.c.h.b16 %v329
        %v428 = vunpack.c.l.b16 %v330
        %v429 = vunpack.c.h.b16 %v330
        %v430 = vunpack.c.l.b16 %v331
        %v431 = vunpack.c.h.b16 %v331
        %v432 = vunpack.c.l.b16 %v332
        %v433 = vunpack.c.h.b16 %v332
        %v434 = vunpack.c.l.b16 %v333
        %v435 = vunpack.c.h.b16 %v333
        %v436 = vunpack.c.l.b16 %v334
        %v437 = vunpack.c.h.b16 %v334
        %v438 = vunpack.c.l.b16 %v335
        %v439 = vunpack.c.h.b16 %v335
        %v440 = vunpack.c.l.b16 %v336
        %v441 = vunpack.c.h.b16 %v336
        %v442 = vunpack.c.l.b16 %v337
        %v443 = vunpack.c.h.b16 %v337
        %v444 = vunpack.c.l.b16 %v338
        %v445 = vunpack.c.h.b16 %v338
        %v446 = vunpack.c.l.b16 %v339
        %v447 = vunpack.c.h.b16 %v339
        %v448 = vunpack.c.l.b16 %v340
        %v449 = vunpack.c.h.b16 %v340
        %v450 = vunpack.c.l.b16 %v341
        %v451 = vunpack.c.h.b16 %v341
        %v452 = vunpack.c.l.b16 %v342
        %v453 = vunpack.c.h.b16 %v342
        %v454 = vunpack.c.l.b16 %v343
        %v455 = vunpack.c.h.b16 %v343
        %v456 = vunpack.c.l.b16 %v344
        %v457 = vunpack.c.h.b16 %v344
        %v458 = vunpack.c.l.b16 %v345
        %v459 = vunpack.c.h.b16 %v345
        %v460 = vunpack.c.l.b16 %v346
        %v461 = vunpack.c.h.b16 %v346
        %v462 = vunpack.c.l.b16 %v347
        %v463 = vunpack.c.h.b16 %v347
        %v464 = vunpack.c.l.b16 %v348
        %v465 = vunpack.c.h.b16 %v348
        %v466 = vpack.c.b16 %v398, %v396
        %v467 = vpack.c.b16 %v399, %v397
        %v468 = vpack.c.b16 %v402, %v400
        %v469 = vpack.c.b16 %v403, %v401
        %v470 = vpack.c.b16 %v406, %v404
        %v471 = vpack.c.b16 %v407, %v405
        %v472 = vpack.c.b16 %v410, %v408
        %v473 = vpack.c.b16 %v411, %v409
        %v474 = vpack.c.b16 %v414, %v412
        %v475 = vpack.c.b16 %v415, %v413
        %v476 = vpack.c.b16 %v418, %v416
        %v477 = vpack.c.b16 %v419, %v417
        %v478 = vpack.c.b16 %v422, %v420
        %v479 = vpack.c.b16 %v423, %v421
        %v480 = vpack.c.b16 %v426, %v424
        %v481 = vpack.c.b16 %v427, %v425
        %v482 = vpack.c.b16 %v430, %v428
        %v483 = vpack.c.b16 %v431, %v429
        %v484 = vpack.c.b16 %v434, %v432
        %v485 = vpack.c.b16 %v435, %v433
        %v486 = vpack.c.b16 %v438, %v436
        %v487 = vpack.c.b16 %v439, %v437
        %v488 = vpack.c.b16 %v442, %v440
        %v489 = vpack.c.b16 %v443, %v441
        %v490 = vpack.c.b16 %v446, %v444
        %v491 = vpack.c.b16 %v447, %v445
        %v492 = vpack.c.b16 %v450, %v448
        %v493 = vpack.c.b16 %v451, %v449
        %v494 = vpack.c.b16 %v454, %v452
        %v495 = vpack.c.b16 %v455, %v453
        %v496 = vpack.c.b16 %v458, %v456
        %v497 = vpack.c.b16 %v459, %v457
        %v498 = vpack.c.b16 %v462, %v460
        %v499 = vpack.c.b16 %v463, %v461
        %v500 = vpack.c.b16 %v464, %v464
        %v501 = vpack.c.b16 %v465, %v465
        %vm536 = vcmask 195584
        %v538 = vsel %vm536, %v313, 0
        %vm540 = vcmask 1043456
        %v542 = vsel %vm540, %v500, 0
        %v545 = vsel %vm540, %v501, 0
        %547 = vmatprep.subr.bf16.mxu0 %v467
        %548 = vmatpush1.bf16.msra.mxu0 %v466
        %549 = vmatprep.subr.bf16.mxu0 %v469
        %550 = vmatpush1.bf16.msra.mxu0 %v468
        %551 = vmatprep.subr.bf16.mxu0 %v471
        %552 = vmatpush1.bf16.msra.mxu0 %v470
        %553 = vmatprep.subr.bf16.mxu0 %v473
        %554 = vmatpush1.bf16.msra.mxu0 %v472
        %555 = vmatprep.subr.bf16.mxu0 %v475
        %556 = vmatpush1.bf16.msra.mxu0 %v474
        %557 = vmatprep.subr.bf16.mxu0 %v477
        %558 = vmatpush1.bf16.msra.mxu0 %v476
        %559 = vmatprep.subr.bf16.mxu0 %v479
        %560 = vmatpush1.bf16.msra.mxu0 %v478
        %561 = vmatprep.subr.bf16.mxu0 %v481
        %562 = vmatpush1.bf16.msra.mxu0 %v480
        %563 = vmatprep.subr.bf16.mxu0 %v483
        %564 = vmatpush1.bf16.msra.mxu0 %v482
        %565 = vmatprep.subr.bf16.mxu0 %v485
        %566 = vmatpush1.bf16.msra.mxu0 %v484
        %567 = vmatprep.subr.bf16.mxu0 %v487
        %568 = vmatpush1.bf16.msra.mxu0 %v486
        %569 = vmatprep.subr.bf16.mxu0 %v489
        %570 = vmatpush1.bf16.msra.mxu0 %v488
        %571 = vmatprep.subr.bf16.mxu0 %v491
        %572 = vmatpush1.bf16.msra.mxu0 %v490
        %573 = vmatprep.subr.bf16.mxu0 %v493
        %574 = vmatpush1.bf16.msra.mxu0 %v492
        %575 = vmatprep.subr.bf16.mxu0 %v495
        %576 = vmatpush1.bf16.msra.mxu0 %v494
        %577 = vmatprep.subr.bf16.mxu0 %v497
        %578 = vmatpush1.bf16.msra.mxu0 %v496
        %579 = vmatprep.mubr.bf16.mxu0 %v312
        %580 = vmatmul.mubr.bf16.gmra.mrb[0].mxu0 %v311
        %v581 = vpop.f32.mrb[0].mxu0
        %v582 = vadd.f32 %v354, %v581
        %v583 = vpop.f32.mrb[0].mxu0
        %v584 = vadd.f32 %v358, %v583
        %v585 = vpop.f32.mrb[0].mxu0
        %v586 = vpop.f32.mrb[0].mxu0
        %587 = vdwg.mxu0
        %588 = vmatprep.subr.bf16.mxu0 %v499
        %589 = vmatpush1.bf16.msra.mxu0 %v498
        %590 = vmatprep.subr.bf16.mxu0 %v545
        %591 = vmatpush1.bf16.msra.mxu0 %v542
        %592 = vmatprep.subr.bf16.mxu0 0
        %593 = vmatpush1.bf16.msra.mxu0 0
        %594 = vmatprep.subr.bf16.mxu0 0
        %595 = vmatpush1.bf16.msra.mxu0 0
        %596 = vmatprep.subr.bf16.mxu0 0
        %597 = vmatpush1.bf16.msra.mxu0 0
        %598 = vmatprep.subr.bf16.mxu0 0
        %599 = vmatpush1.bf16.msra.mxu0 0
        %600 = vmatprep.subr.bf16.mxu0 0
        %601 = vmatpush1.bf16.msra.mxu0 0
        %602 = vmatprep.subr.bf16.mxu0 0
        %603 = vmatpush1.bf16.msra.mxu0 0
        %604 = vmatprep.subr.bf16.mxu0 0
        %605 = vmatpush1.bf16.msra.mxu0 0
        %606 = vmatprep.subr.bf16.mxu0 0
        %607 = vmatpush1.bf16.msra.mxu0 0
        %608 = vmatprep.subr.bf16.mxu0 0
        %609 = vmatpush1.bf16.msra.mxu0 0
        %610 = vmatprep.subr.bf16.mxu0 0
        %611 = vmatpush1.bf16.msra.mxu0 0
        %612 = vmatprep.subr.bf16.mxu0 0
        %613 = vmatpush1.bf16.msra.mxu0 0
        %614 = vmatprep.subr.bf16.mxu0 0
        %615 = vmatpush1.bf16.msra.mxu0 0
        %616 = vmatprep.subr.bf16.mxu0 0
        %617 = vmatpush1.bf16.msra.mxu0 0
        %618 = vmatprep.subr.bf16.mxu0 0
        %619 = vmatpush1.bf16.msra.mxu0 0
        %620 = vmatprep.mubr.bf16.mxu0 0
        %621 = vmatmul.mubr.bf16.gmra.mrb[0].mxu0 %v538
        %v622 = vpop.f32.mrb[0].mxu0
        %v623 = vadd.f32 %v582, %v622
        %v624 = vpop.f32.mrb[0].mxu0
        %v625 = vadd.f32 %v584, %v624
        %v626 = vpop.f32.mrb[0].mxu0
        %v627 = vpop.f32.mrb[0].mxu0
        %628 = vdwg.mxu0
        %v629 = vmax.f32 %v623, 0.0
        %v630 = vmax.f32 %v625, 0.0
        %v631 = vpack.c.bf16 %v629, %v629
        %v632 = vpack.c.bf16 %v630, %v630
        %v633 = vld [vmem:[#allocation4] sm:$0xf]
        %v634 = vld [vmem:[#allocation4 + $0x4] sm:$0xf]
        %v635 = vld [vmem:[#allocation4 + $0x8] sm:$0xf]
        %v636 = vld [vmem:[#allocation4 + $0xc] sm:$0xf]
        %v637 = vld [vmem:[#allocation4 + $0x10] sm:$0xf]
        %v638 = vld [vmem:[#allocation4 + $0x14] sm:$0xf]
        %v639 = vld [vmem:[#allocation4 + $0x18] sm:$0xf]
        %v640 = vld [vmem:[#allocation4 + $0x1c] sm:$0xf]
        %v641 = vld [vmem:[#allocation4 + $0x20] sm:$0xf]
        %v642 = vld [vmem:[#allocation4 + $0x24] sm:$0xf]
        %v643 = vld [vmem:[#allocation4 + $0x28] sm:$0xf]
        %v644 = vld [vmem:[#allocation4 + $0x2c] sm:$0xf]
        %v645 = vld [vmem:[#allocation4 + $0x30] sm:$0xf]
        %v646 = vld [vmem:[#allocation4 + $0x34] sm:$0xf]
        %v647 = vld [vmem:[#allocation4 + $0x38] sm:$0xf]
        %v648 = vld [vmem:[#allocation4 + $0x3c] sm:$0xf]
        %v649 = vld [vmem:[#allocation4 + $0x40] sm:$0xf]
        %v650 = vld [vmem:[#allocation4 + $0x44] sm:$0xf]
        %v651 = vld [vmem:[#allocation4 + $0x48] sm:$0xf]
        %v652 = vld [vmem:[#allocation4 + $0x4c] sm:$0xf]
        %v653 = vld [vmem:[#allocation4 + $0x50] sm:$0xf]
        %v654 = vld [vmem:[#allocation4 + $0x54] sm:$0xf]
        %v655 = vld [vmem:[#allocation4 + $0x58] sm:$0xf]
        %v656 = vld [vmem:[#allocation4 + $0x5c] sm:$0xf]
        %v657 = vld [vmem:[#allocation4 + $0x60] sm:$0xf]
        %v658 = vld [vmem:[#allocation4 + $0x64] sm:$0xf]
        %v659 = vld [vmem:[#allocation4 + $0x68] sm:$0xf]
        %v660 = vld [vmem:[#allocation4 + $0x6c] sm:$0xf]
        %v661 = vld [vmem:[#allocation4 + $0x70] sm:$0xf]
        %v662 = vld [vmem:[#allocation4 + $0x74] sm:$0xf]
        %v663 = vld [vmem:[#allocation4 + $0x78] sm:$0xf]
        %v664 = vld [vmem:[#allocation4 + $0x7c] sm:$0xf]
        %v665 = vld [vmem:[%s4] sm:$0x1]
        %v667 = vlaneseq
        %v668 = vshrl.u32 %v667, 7
        %v669 = vsub.s32 0, %v668
        %v670 = vrot.slane %v665, %v669
        %v704 = vunpack.c.l.b16 %v633
        %v705 = vunpack.c.l.b16 %v634
        %v706 = vunpack.c.l.b16 %v635
        %v707 = vunpack.c.l.b16 %v636
        %v708 = vunpack.c.l.b16 %v637
        %v709 = vunpack.c.l.b16 %v638
        %v710 = vunpack.c.l.b16 %v639
        %v711 = vunpack.c.l.b16 %v640
        %v712 = vunpack.c.l.b16 %v641
        %v713 = vunpack.c.l.b16 %v642
        %v714 = vunpack.c.l.b16 %v643
        %v715 = vunpack.c.l.b16 %v644
        %v716 = vunpack.c.l.b16 %v645
        %v717 = vunpack.c.l.b16 %v646
        %v718 = vunpack.c.l.b16 %v647
        %v719 = vunpack.c.l.b16 %v648
        %v720 = vunpack.c.l.b16 %v649
        %v721 = vunpack.c.l.b16 %v650
        %v722 = vunpack.c.l.b16 %v651
        %v723 = vunpack.c.l.b16 %v652
        %v724 = vunpack.c.l.b16 %v653
        %v725 = vunpack.c.l.b16 %v654
        %v726 = vunpack.c.l.b16 %v655
        %v727 = vunpack.c.l.b16 %v656
        %v728 = vunpack.c.l.b16 %v657
        %v729 = vunpack.c.l.b16 %v658
        %v730 = vunpack.c.l.b16 %v659
        %v731 = vunpack.c.l.b16 %v660
        %v732 = vunpack.c.l.b16 %v661
        %v733 = vunpack.c.l.b16 %v662
        %v734 = vunpack.c.l.b16 %v663
        %v735 = vunpack.c.l.b16 %v664
        %v736 = vpack.c.b16 %v705, %v704
        %v737 = vpack.c.b16 %v707, %v706
        %v738 = vpack.c.b16 %v709, %v708
        %v739 = vpack.c.b16 %v711, %v710
        %v740 = vpack.c.b16 %v713, %v712
        %v741 = vpack.c.b16 %v715, %v714
        %v742 = vpack.c.b16 %v717, %v716
        %v743 = vpack.c.b16 %v719, %v718
        %v744 = vpack.c.b16 %v721, %v720
        %v745 = vpack.c.b16 %v723, %v722
        %v746 = vpack.c.b16 %v725, %v724
        %v747 = vpack.c.b16 %v727, %v726
        %v748 = vpack.c.b16 %v729, %v728
        %v749 = vpack.c.b16 %v731, %v730
        %v750 = vpack.c.b16 %v733, %v732
        %v751 = vpack.c.b16 %v735, %v734
        %768 = vmatprep.subr.bf16.mxu0 0
        %769 = vmatpush1.bf16.msra.mxu0 %v736
        %770 = vmatprep.subr.bf16.mxu0 0
        %771 = vmatpush1.bf16.msra.mxu0 %v737
        %772 = vmatprep.subr.bf16.mxu0 0
        %773 = vmatpush1.bf16.msra.mxu0 %v738
        %774 = vmatprep.subr.bf16.mxu0 0
        %775 = vmatpush1.bf16.msra.mxu0 %v739
        %776 = vmatprep.subr.bf16.mxu0 0
        %777 = vmatpush1.bf16.msra.mxu0 %v740
        %778 = vmatprep.subr.bf16.mxu0 0
        %779 = vmatpush1.bf16.msra.mxu0 %v741
        %780 = vmatprep.subr.bf16.mxu0 0
        %781 = vmatpush1.bf16.msra.mxu0 %v742
        %782 = vmatprep.subr.bf16.mxu0 0
        %783 = vmatpush1.bf16.msra.mxu0 %v743
        %784 = vmatprep.subr.bf16.mxu0 0
        %785 = vmatpush1.bf16.msra.mxu0 %v744
        %786 = vmatprep.subr.bf16.mxu0 0
        %787 = vmatpush1.bf16.msra.mxu0 %v745
        %788 = vmatprep.subr.bf16.mxu0 0
        %789 = vmatpush1.bf16.msra.mxu0 %v746
        %790 = vmatprep.subr.bf16.mxu0 0
        %791 = vmatpush1.bf16.msra.mxu0 %v747
        %792 = vmatprep.subr.bf16.mxu0 0
        %793 = vmatpush1.bf16.msra.mxu0 %v748
        %794 = vmatprep.subr.bf16.mxu0 0
        %795 = vmatpush1.bf16.msra.mxu0 %v749
        %796 = vmatprep.subr.bf16.mxu0 0
        %797 = vmatpush1.bf16.msra.mxu0 %v750
        %798 = vmatprep.subr.bf16.mxu0 0
        %799 = vmatpush1.bf16.msra.mxu0 %v751
        %800 = vmatprep.mubr.bf16.mxu0 %v632
        %801 = vmatmul.mubr.bf16.gmra.mrb[0].mxu0 %v631
        %v802 = vpop.f32.mrb[0].mxu0
        %v803 = vadd.f32 %v670, %v802
        %v804 = vpop.f32.mrb[0].mxu0
        %v805 = vpop.f32.mrb[0].mxu0
        %v806 = vpop.f32.mrb[0].mxu0
        %807 = vdwg.mxu0
        %v808 = vmax.f32 %v803, 0.0
        %v809 = vpack.c.bf16 %v808, %v808
        %v810 = vld [vmem:[%s5] sm:$0xf]
        %v811 = vld [vmem:[%s5 + $0x4] sm:$0xf]
        %v812 = vld [vmem:[%s5 + $0x8] sm:$0xf]
        %v813 = vld [vmem:[%s5 + $0xc] sm:$0xf]
        %v814 = vld [vmem:[%s5 + $0x10] sm:$0xf]
        %v815 = vld [vmem:[%s5 + $0x14] sm:$0xf]
        %v816 = vld [vmem:[%s5 + $0x18] sm:$0xf]
        %v817 = vld [vmem:[%s5 + $0x1c] sm:$0xf]
        %v818 = vld [vmem:[%s5 + $0x20] sm:$0xf]
        %v819 = vld [vmem:[%s5 + $0x24] sm:$0xf]
        %v820 = vld [vmem:[%s5 + $0x28] sm:$0xf]
        %v821 = vld [vmem:[%s5 + $0x2c] sm:$0xf]
        %v822 = vld [vmem:[%s5 + $0x30] sm:$0xf]
        %v823 = vld [vmem:[%s5 + $0x34] sm:$0xf]
        %v824 = vld [vmem:[%s5 + $0x38] sm:$0xf]
        %v825 = vld [vmem:[%s5 + $0x3c] sm:$0xf]
        %v826 = vld [vmem:[%s6] sm:$0x1]
        %v828 = vlaneseq
        %v829 = vshrl.u32 %v828, 7
        %v830 = vsub.s32 0, %v829
        %v831 = vrot.slane %v826, %v830
        %v849 = vunpack.c.l.b16 %v810
        %v850 = vunpack.c.l.b16 %v811
        %v851 = vunpack.c.l.b16 %v812
        %v852 = vunpack.c.l.b16 %v813
        %v853 = vunpack.c.l.b16 %v814
        %v854 = vunpack.c.l.b16 %v815
        %v855 = vunpack.c.l.b16 %v816
        %v856 = vunpack.c.l.b16 %v817
        %v857 = vunpack.c.l.b16 %v818
        %v858 = vunpack.c.l.b16 %v819
        %v859 = vunpack.c.l.b16 %v820
        %v860 = vunpack.c.l.b16 %v821
        %v861 = vunpack.c.l.b16 %v822
        %v862 = vunpack.c.l.b16 %v823
        %v863 = vunpack.c.l.b16 %v824
        %v864 = vunpack.c.l.b16 %v825
        %v865 = vpack.c.b16 %v850, %v849
        %v866 = vpack.c.b16 %v852, %v851
        %v867 = vpack.c.b16 %v854, %v853
        %v868 = vpack.c.b16 %v856, %v855
        %v869 = vpack.c.b16 %v858, %v857
        %v870 = vpack.c.b16 %v860, %v859
        %v871 = vpack.c.b16 %v862, %v861
        %v872 = vpack.c.b16 %v864, %v863
        %881 = vmatprep.subr.bf16.mxu0 0
        %882 = vmatpush1.bf16.msra.mxu0 %v865
        %883 = vmatprep.subr.bf16.mxu0 0
        %884 = vmatpush1.bf16.msra.mxu0 %v866
        %885 = vmatprep.subr.bf16.mxu0 0
        %886 = vmatpush1.bf16.msra.mxu0 %v867
        %887 = vmatprep.subr.bf16.mxu0 0
        %888 = vmatpush1.bf16.msra.mxu0 %v868
        %889 = vmatprep.subr.bf16.mxu0 0
        %890 = vmatpush1.bf16.msra.mxu0 %v869
        %891 = vmatprep.subr.bf16.mxu0 0
        %892 = vmatpush1.bf16.msra.mxu0 %v870
        %893 = vmatprep.subr.bf16.mxu0 0
        %894 = vmatpush1.bf16.msra.mxu0 %v871
        %895 = vmatprep.subr.bf16.mxu0 0
        %896 = vmatpush1.bf16.msra.mxu0 %v872
        %897 = vmatprep.subr.bf16.mxu0 0
        %898 = vmatpush1.bf16.msra.mxu0 0
        %899 = vmatprep.subr.bf16.mxu0 0
        %900 = vmatpush1.bf16.msra.mxu0 0
        %901 = vmatprep.subr.bf16.mxu0 0
        %902 = vmatpush1.bf16.msra.mxu0 0
        %903 = vmatprep.subr.bf16.mxu0 0
        %904 = vmatpush1.bf16.msra.mxu0 0
        %905 = vmatprep.subr.bf16.mxu0 0
        %906 = vmatpush1.bf16.msra.mxu0 0
        %907 = vmatprep.subr.bf16.mxu0 0
        %908 = vmatpush1.bf16.msra.mxu0 0
        %909 = vmatprep.subr.bf16.mxu0 0
        %910 = vmatpush1.bf16.msra.mxu0 0
        %911 = vmatprep.subr.bf16.mxu0 0
        %912 = vmatpush1.bf16.msra.mxu0 0
        %913 = vmatprep.mubr.bf16.mxu0 0
        %914 = vmatmul.mubr.bf16.gmra.mrb[0].mxu0 %v809
        %v915 = vpop.f32.mrb[0].mxu0
        %v916 = vadd.f32 %v831, %v915
        %v917 = vpop.f32.mrb[0].mxu0
        %v918 = vpop.f32.mrb[0].mxu0
        %v919 = vpop.f32.mrb[0].mxu0
        %920 = vdwg.mxu0
        %vm921 = vcmask 64512
        %922 = vst.msk [vmem:[%s306] sm:$0xff] %vm921, %v916
        %p923 = scmp.lt.s32.totalorder %s20, 1
        %s924 = scalar_select %p923, %s20, 1
        %s925 = smul.addr %s924, 8
        %s926 = scalar_lea.vmem %s7, %s925
        // Predicated region
        $region57: #{tpu_custom_call.1} parent=47 // pred_check
          %p927 = pneg %p190
        $region58: #{tpu_custom_call.1} parent=47 // pred_check_branch
          %929 = sbr.rel (%p927) target = $region60
        $region59: #{tpu_custom_call.1} parent=47 // pred_region
          _
        $region60: #{tpu_custom_call.1} parent=47 // pred_fallthru
          _
      $region48: #{tpu_custom_call.1} parent=5 // pred_fallthru
        _
      %p930 = scmp.le.s32.totalorder 2, %s15
      // Predicated region
      $region61: #{tpu_custom_call.1} parent=5 // pred_check
        %p931 = pneg %p930
      $region62: #{tpu_custom_call.1} parent=5 // pred_check_branch
        %933 = sbr.rel (%p931) target = $region64
      $region63: #{tpu_custom_call.1} parent=5 // pred_region
        %s934 = ssub.s32 %s15, 2
        // Predicated region
        $region65: #{tpu_custom_call.1} parent=63 // pred_check
          %p935 = pneg %p196
        $region66: #{tpu_custom_call.1} parent=63 // pred_check_branch
          %937 = sbr.rel (%p935) target = $region68
        $region67: #{tpu_custom_call.1} parent=63 // pred_region
          %p938 = scmp.lt.s32.totalorder %s21, 1
          %s939 = scalar_select %p938, %s21, 1
          %s940 = smul.addr %s939, 8
          %s941 = scalar_lea.vmem %s7, %s940
        $region68: #{tpu_custom_call.1} parent=63 // pred_fallthru
          _
      $region64: #{tpu_custom_call.1} parent=5 // pred_fallthru
        _
    $region6: #{tpu_custom_call.1} parent=1 // loop_footer
      %s19 = sadd.s32 1, %s15
    $region7: #{tpu_custom_call.1} parent=1 // loop_footer_branch
      %14 = sbr.rel target = $region3
    $region8: #{tpu_custom_call.1} parent=1 // loop_exit
      _
    %942 = vsyncpa [#allocation3], 1
    %s943 = scalar_lea.sflag [#allocation3], 1
    %944 = vsyncpa %s943, 1
    %945 = vsyncpa [#allocation5], 1

</llo_original>
